<compile_context>
chip_gen: v5e
topology: v5e:2x2
jax: 0.10.0
libtpu: 0.0.40
codegen_flags: <defaults>
</compile_context>

<pallas_src>
import jax
import jax.numpy as jnp
from jax.experimental import pallas as pl
from jax.experimental.pallas import tpu as pltpu

NUM_INPUTS = 4      # CartPole-v0 observation_space.shape[0]
HIDDEN = 64         # hidden_layer
NUM_OUTPUTS = 2     # CartPole-v0 action_space.n
DEFAULT_TB = 4096   # batch tile (rows per grid step); sweep 2048-8192 for big batches


def mlp_kernel(x_ref, w1_ref, b1_ref, w2_ref, b2_ref, o_ref):
    # linear1: K=4 contraction -- tiny, latency not throughput; accumulate in f32.
    h = jnp.dot(x_ref[...], w1_ref[...], preferred_element_type=jnp.float32)
    h = jnp.tanh(h + b1_ref[...])            # b1 is [1, HIDDEN], broadcasts; tanh on EUP
    # linear2: only the 2 real output lanes are computed and stored (no lane padding).
    o = jnp.dot(h, w2_ref[...], preferred_element_type=jnp.float32)
    o_ref[...] = (o + b2_ref[...]).astype(o_ref.dtype)


def _round_up(a, m):
    return (a + m - 1) // m * m


def neural_network_forward(x, w1, b1, w2, b2, *, tb=DEFAULT_TB):
    """x: [B, NUM_INPUTS] f32; returns [B, NUM_OUTPUTS] f32."""
    x = jnp.asarray(x, jnp.float32)
    B = x.shape[0]
    w1 = jnp.asarray(w1, jnp.float32).reshape(NUM_INPUTS, HIDDEN)
    b1 = jnp.asarray(b1, jnp.float32).reshape(1, HIDDEN)
    w2 = jnp.asarray(w2, jnp.float32).reshape(HIDDEN, NUM_OUTPUTS)
    b2 = jnp.asarray(b2, jnp.float32).reshape(1, NUM_OUTPUTS)

    # Batch tile: multiple of 8 (sublane), capped at `tb`.  No whole-array pad: the grid is
    # pl.cdiv(B, TB) and the ragged last block is masked by the Pallas pipeline.
    TB = min(_round_up(max(tb, 8), 8), _round_up(max(B, 1), 8))
    grid = (pl.cdiv(B, TB),)

    flops = 2 * B * (NUM_INPUTS * HIDDEN + HIDDEN * NUM_OUTPUTS)
    bytes_accessed = 4 * (B * NUM_INPUTS + B * NUM_OUTPUTS
                          + NUM_INPUTS * HIDDEN + HIDDEN
                          + HIDDEN * NUM_OUTPUTS + NUM_OUTPUTS)

    out = pl.pallas_call(
        mlp_kernel,
        out_shape=jax.ShapeDtypeStruct((B, NUM_OUTPUTS), jnp.float32),
        grid_spec=pltpu.PrefetchScalarGridSpec(
            num_scalar_prefetch=0,
            grid=grid,
            in_specs=[
                # x: tiled along batch, auto double-buffered DMA pipeline.
                pl.BlockSpec((TB, NUM_INPUTS), lambda i: (i, 0)),
                # weights / biases: constant index_map -> VMEM-resident across all steps.
                pl.BlockSpec((NUM_INPUTS, HIDDEN), lambda i: (0, 0)),
                pl.BlockSpec((1, HIDDEN), lambda i: (0, 0)),
                pl.BlockSpec((HIDDEN, NUM_OUTPUTS), lambda i: (0, 0)),
                pl.BlockSpec((1, NUM_OUTPUTS), lambda i: (0, 0)),
            ],
            # Output block is (TB, 2): last dim equals the full array dim, so no lane padding
            # is written back to HBM.
            out_specs=pl.BlockSpec((TB, NUM_OUTPUTS), lambda i: (i, 0)),
        ),
        compiler_params=pltpu.CompilerParams(
            dimension_semantics=("parallel",),        # shard batch tiles across TCs (v7x)
            vmem_limit_bytes=32 * 1024 * 1024,        # TB=4096 needs ~12 MiB; lift v5e's 16 MiB default
        ),
        cost_estimate=pl.CostEstimate(
            flops=flops,
            transcendentals=B * HIDDEN,
            bytes_accessed=bytes_accessed,
        ),
    )(x, w1, b1, w2, b2)

    return out


def init_params(key):
    """Deterministic init mimicking PyTorch nn.Linear default U(-1/sqrt(fan_in), 1/sqrt(fan_in))."""
    k1, k2, k3, k4 = jax.random.split(key, 4)
    bound1 = 1.0 / jnp.sqrt(float(NUM_INPUTS))
    bound2 = 1.0 / jnp.sqrt(float(HIDDEN))
    w1 = jax.random.uniform(k1, (NUM_INPUTS, HIDDEN), jnp.float32, -bound1, bound1)
    b1 = jax.random.uniform(k2, (1, HIDDEN), jnp.float32, -bound1, bound1)
    w2 = jax.random.uniform(k3, (HIDDEN, NUM_OUTPUTS), jnp.float32, -bound2, bound2)
    b2 = jax.random.uniform(k4, (1, NUM_OUTPUTS), jnp.float32, -bound2, bound2)
    return w1, b1, w2, b2


if __name__ == "__main__":
    key = jax.random.PRNGKey(0)
    kx, kp = jax.random.split(key)
    w1, b1, w2, b2 = init_params(kp)

    # Small shape consistent with the module (batch of CartPole observations).
    batch = 8
    x = jax.random.normal(kx, (batch, NUM_INPUTS), jnp.float32)
    out = jax.block_until_ready(neural_network_forward(x, w1, b1, w2, b2))
    ref = jnp.tanh(x @ w1 + b1) @ w2 + b2
    assert out.shape == (batch, NUM_OUTPUTS)
    assert jnp.allclose(out, ref, atol=1e-5, rtol=1e-5)

    # Second check: multiple batch tiles + ragged last block (600 rows, 256-row tiles).
    batch2 = 600
    x2 = jax.random.normal(jax.random.PRNGKey(1), (batch2, NUM_INPUTS), jnp.float32)
    out2 = jax.block_until_ready(neural_network_forward(x2, w1, b1, w2, b2, tb=256))
    ref2 = jnp.tanh(x2 @ w1 + b1) @ w2 + b2
    assert out2.shape == (batch2, NUM_OUTPUTS)
    assert jnp.allclose(out2, ref2, atol=1e-5, rtol=1e-5)

    # Third check: default large tile path (single ragged block, no padding op at all).
    batch3 = 600
    out3 = jax.block_until_ready(neural_network_forward(x2, w1, b1, w2, b2))
    assert jnp.allclose(out3, ref2, atol=1e-5, rtol=1e-5)

    print("KERNEL_OK")
</pallas_src>

<mosaic_0001>
module attributes {stable_mosaic.version = 11 : i64} {
  func.func @mlp_kernel(%arg0: i32, %arg1: memref<8x4xf32, #tpu.memory_space<vmem>>, %arg2: memref<4x64xf32, #tpu.memory_space<vmem>>, %arg3: memref<1x64xf32, #tpu.memory_space<vmem>>, %arg4: memref<64x2xf32, #tpu.memory_space<vmem>>, %arg5: memref<1x2xf32, #tpu.memory_space<vmem>>, %arg6: memref<8x2xf32, #tpu.memory_space<vmem>>) attributes {dimension_semantics = [#tpu.dimension_semantics<parallel>], iteration_bounds = array<i64: 1>, scalar_prefetch = 0 : i64, scratch_operands = 0 : i64, tpu.core_type = #tpu.core_type<tc>, window_params = [{transform_indices = @transform_0, window_bounds = array<i64: 8, 4>}, {pipeline_mode = #tpu.pipeline_mode<synchronous>, transform_indices = @transform_1, window_bounds = array<i64: 4, 64>}, {pipeline_mode = #tpu.pipeline_mode<synchronous>, transform_indices = @transform_2, window_bounds = array<i64: 1, 64>}, {pipeline_mode = #tpu.pipeline_mode<synchronous>, transform_indices = @transform_3, window_bounds = array<i64: 64, 2>}, {pipeline_mode = #tpu.pipeline_mode<synchronous>, transform_indices = @transform_4, window_bounds = array<i64: 1, 2>}, {transform_indices = @transform_5, window_bounds = array<i64: 8, 2>}]} {
    %c0 = arith.constant 0 : index
    %c0_0 = arith.constant 0 : index
    %0 = vector.load %arg1[%c0, %c0_0] : memref<8x4xf32, #tpu.memory_space<vmem>>, vector<8x4xf32>
    %c0_1 = arith.constant 0 : index
    %c0_2 = arith.constant 0 : index
    %1 = vector.load %arg2[%c0_1, %c0_2] : memref<4x64xf32, #tpu.memory_space<vmem>>, vector<4x64xf32>
    %cst = arith.constant dense<0.000000e+00> : vector<8x64xf32>
    %2 = tpu.matmul %0, %1, %cst {dimension_numbers = #tpu.dot_dimension_numbers<[1], [0], [0], [1], [0, 0, 1, 1], [], []>} : vector<8x4xf32>, vector<4x64xf32>, vector<8x64xf32> -> vector<8x64xf32>
    %c0_3 = arith.constant 0 : index
    %c0_4 = arith.constant 0 : index
    %3 = vector.load %arg3[%c0_3, %c0_4] : memref<1x64xf32, #tpu.memory_space<vmem>>, vector<1x64xf32>
    %4 = vector.broadcast %3 : vector<1x64xf32> to vector<8x64xf32>
    %5 = arith.addf %2, %4 : vector<8x64xf32>
    %6 = math.tanh %5 : vector<8x64xf32>
    %c0_5 = arith.constant 0 : index
    %c0_6 = arith.constant 0 : index
    %7 = vector.load %arg4[%c0_5, %c0_6] : memref<64x2xf32, #tpu.memory_space<vmem>>, vector<64x2xf32>
    %cst_7 = arith.constant dense<0.000000e+00> : vector<8x2xf32>
    %8 = tpu.matmul %6, %7, %cst_7 {dimension_numbers = #tpu.dot_dimension_numbers<[1], [0], [0], [1], [0, 0, 1, 1], [], []>} : vector<8x64xf32>, vector<64x2xf32>, vector<8x2xf32> -> vector<8x2xf32>
    %c0_8 = arith.constant 0 : index
    %c0_9 = arith.constant 0 : index
    %9 = vector.load %arg5[%c0_8, %c0_9] : memref<1x2xf32, #tpu.memory_space<vmem>>, vector<1x2xf32>
    %10 = vector.broadcast %9 : vector<1x2xf32> to vector<8x2xf32>
    %11 = arith.addf %8, %10 : vector<8x2xf32>
    %c0_10 = arith.constant 0 : index
    %c0_11 = arith.constant 0 : index
    %12 = vector.load %arg6[%c0_10, %c0_11] : memref<8x2xf32, #tpu.memory_space<vmem>>, vector<8x2xf32>
    tpu.vector_store %arg6[%c0_10, %c0_11], %11 {strides = array<i32>} : memref<8x2xf32, #tpu.memory_space<vmem>>, vector<8x2xf32>,
    return
  }
  func.func @transform_0(%arg0: i32) -> (i32, i32) {
    %c0_i32 = arith.constant 0 : i32
    %c0_i32_0 = arith.constant 0 : i32
    return %arg0, %c0_i32 : i32, i32
  }
  func.func @transform_1(%arg0: i32) -> (i32, i32) {
    %c0_i32 = arith.constant 0 : i32
    %c0_i32_0 = arith.constant 0 : i32
    %c0_i32_1 = arith.constant 0 : i32
    return %c0_i32, %c0_i32_0 : i32, i32
  }
  func.func @transform_2(%arg0: i32) -> (i32, i32) {
    %c0_i32 = arith.constant 0 : i32
    %c0_i32_0 = arith.constant 0 : i32
    %c0_i32_1 = arith.constant 0 : i32
    return %c0_i32, %c0_i32_0 : i32, i32
  }
  func.func @transform_3(%arg0: i32) -> (i32, i32) {
    %c0_i32 = arith.constant 0 : i32
    %c0_i32_0 = arith.constant 0 : i32
    %c0_i32_1 = arith.constant 0 : i32
    return %c0_i32, %c0_i32_0 : i32, i32
  }
  func.func @transform_4(%arg0: i32) -> (i32, i32) {
    %c0_i32 = arith.constant 0 : i32
    %c0_i32_0 = arith.constant 0 : i32
    %c0_i32_1 = arith.constant 0 : i32
    return %c0_i32, %c0_i32_0 : i32, i32
  }
  func.func @transform_5(%arg0: i32) -> (i32, i32) {
    %c0_i32 = arith.constant 0 : i32
    %c0_i32_0 = arith.constant 0 : i32
    return %arg0, %c0_i32 : i32, i32
  }
}

</mosaic_0001>

<llo_original>
// kernel: tpu_custom_call.1
$region0: #{tpu_custom_call.1}
  #allocation0 [shape = 'u32[]', space=smem, size = 0x4, offset = 0x4, fixed_abs, tag = 'smem constant byte address 0x4 - core index']
  #allocation1 [shape = 'u32[72,128]{1,0:T(1,128)}', space=vmem, size = 0x9000, scoped, tag = 'internal scratch']
  %s0 = inlined_call_operand.vmem [shape: f32[8,4], index: 0, kind: input, shape index: {}]
  %s1 = inlined_call_operand.vmem [shape: f32[4,64], index: 1, kind: input, shape index: {}]
  %s2 = inlined_call_operand.vmem [shape: f32[1,64], index: 2, kind: input, shape index: {}]
  %s3 = inlined_call_operand.vmem [shape: f32[64,2], index: 3, kind: input, shape index: {}]
  %s4 = inlined_call_operand.vmem [shape: f32[1,2], index: 4, kind: input, shape index: {}]
  %s5 = inlined_call_operand.vmem [shape: f32[8,2], index: 5, kind: output, shape index: {}]
  %s6 = sld [smem:[#allocation0]]
  $region30: #{tpu_custom_call.1} parent=0
    _
  %s8 = ssub.s32 1, %s6
  %s9 = scalar_select 0, %s8, %s6
  // Predicated region
  $region2: #{tpu_custom_call.1} parent=0 // pred_check
    _
  $region3: #{tpu_custom_call.1} parent=0 // pred_check_branch
    %11 = sbr.rel (0) target = $region5
  $region4: #{tpu_custom_call.1} parent=0 // pred_region
    _
  $region5: #{tpu_custom_call.1} parent=0 // pred_fallthru
    _
  // Predicated region
  $region6: #{tpu_custom_call.1} parent=0 // pred_check
    _
  $region7: #{tpu_custom_call.1} parent=0 // pred_check_branch
    %13 = sbr.rel (0) target = $region9
  $region8: #{tpu_custom_call.1} parent=0 // pred_region
    _
  $region9: #{tpu_custom_call.1} parent=0 // pred_fallthru
    _
  // Predicated region
  $region10: #{tpu_custom_call.1} parent=0 // pred_check
    _
  $region11: #{tpu_custom_call.1} parent=0 // pred_check_branch
    %15 = sbr.rel (0) target = $region13
  $region12: #{tpu_custom_call.1} parent=0 // pred_region
    _
  $region13: #{tpu_custom_call.1} parent=0 // pred_fallthru
    _
  // Predicated region
  $region14: #{tpu_custom_call.1} parent=0 // pred_check
    _
  $region15: #{tpu_custom_call.1} parent=0 // pred_check_branch
    %17 = sbr.rel (0) target = $region17
  $region16: #{tpu_custom_call.1} parent=0 // pred_region
    _
  $region17: #{tpu_custom_call.1} parent=0 // pred_fallthru
    _
  // Predicated region
  $region18: #{tpu_custom_call.1} parent=0 // pred_check
    _
  $region19: #{tpu_custom_call.1} parent=0 // pred_check_branch
    %19 = sbr.rel (0) target = $region21
  $region20: #{tpu_custom_call.1} parent=0 // pred_region
    _
  $region21: #{tpu_custom_call.1} parent=0 // pred_fallthru
    _
  %v20 = vld [vmem:[%s0] sm:$0xff]
  %v21 = vld [vmem:[%s1] sm:$0xf]
  %v22 = vld [vmem:[%s2] sm:$0x1]
  %v24 = vperm.slane %v22, 0
  %vm26 = vcmask 31744
  %v28 = vsel %vm26, %v20, 0
  %vm30 = vcmask 1043456
  %v32 = vsel %vm30, %v21, 0
  %34 = vmatpush.msra.mxu0 0.0
  %35 = vmatpush.msra.mxu0 0.0
  %36 = vmatpush.msra.mxu0 0.0
  %37 = vmatpush.msra.mxu0 0.0
  %38 = vmatpush.msra.mxu0 0.0
  %39 = vmatpush.msra.mxu0 0.0
  %40 = vmatpush.msra.mxu0 0.0
  %41 = vmatpush.msra.mxu0 0.0
  %42 = vmatpush.msra.mxu0 0.0
  %43 = vmatpush.msra.mxu0 0.0
  %44 = vmatpush.msra.mxu0 0.0
  %45 = vmatpush.msra.mxu0 0.0
  %46 = vmatpush.msra.mxu0 0.0
  %47 = vmatpush.msra.mxu0 0.0
  %48 = vmatpush.msra.mxu0 0.0
  %49 = vmatpush.msra.mxu0 %v32
  %50 = vmatmul.f32.gmra.mxu0 %v28
  %v51 = vpop.f32.mrf.mxu0
  %v52 = vadd.f32 %v24, %v51
  %53 = vdwg.mxu0
  %v54 = vtanh.pop %v52
  %v55 = vld [vmem:[%s3] sm:$0xff]
  %v56 = vld [vmem:[%s3 + $0x8] sm:$0xff]
  %v57 = vld [vmem:[%s3 + $0x10] sm:$0xff]
  %v58 = vld [vmem:[%s3 + $0x18] sm:$0xff]
  %v59 = vld [vmem:[%s3 + $0x20] sm:$0xff]
  %v60 = vld [vmem:[%s3 + $0x28] sm:$0xff]
  %v61 = vld [vmem:[%s3 + $0x30] sm:$0xff]
  %v62 = vld [vmem:[%s3 + $0x38] sm:$0xff]
  %v63 = vld [vmem:[%s4] sm:$0x1]
  %v65 = vperm.slane %v63, 0
  %vm67 = vcmask 523264
  %v69 = vsel %vm67, %v54, 0
  %71 = vmatpush.msra.mxu0 0.0
  %72 = vmatpush.msra.mxu0 0.0
  %73 = vmatpush.msra.mxu0 0.0
  %74 = vmatpush.msra.mxu0 0.0
  %75 = vmatpush.msra.mxu0 0.0
  %76 = vmatpush.msra.mxu0 0.0
  %77 = vmatpush.msra.mxu0 0.0
  %78 = vmatpush.msra.mxu0 0.0
  %79 = vmatpush.msra.mxu0 %v62
  %80 = vmatpush.msra.mxu0 %v61
  %81 = vmatpush.msra.mxu0 %v60
  %82 = vmatpush.msra.mxu0 %v59
  %83 = vmatpush.msra.mxu0 %v58
  %84 = vmatpush.msra.mxu0 %v57
  %85 = vmatpush.msra.mxu0 %v56
  %86 = vmatpush.msra.mxu0 %v55
  %87 = vmatmul.f32.gmra.mxu0 %v69
  %v88 = vpop.f32.mrf.mxu0
  %v89 = vadd.f32 %v65, %v88
  %90 = vdwg.mxu0
  %vm91 = vcmask 15360
  %92 = vst.msk [vmem:[%s5] sm:$0xff] %vm91, %v89
  // Predicated region
  $region22: #{tpu_custom_call.1} parent=0 // pred_check
    _
  $region23: #{tpu_custom_call.1} parent=0 // pred_check_branch
    %94 = sbr.rel (0) target = $region25
  $region24: #{tpu_custom_call.1} parent=0 // pred_region
    _
  $region25: #{tpu_custom_call.1} parent=0 // pred_fallthru
    _
  // Predicated region
  $region26: #{tpu_custom_call.1} parent=0 // pred_check
    _
  $region27: #{tpu_custom_call.1} parent=0 // pred_check_branch
    %96 = sbr.rel (0) target = $region29
  $region28: #{tpu_custom_call.1} parent=0 // pred_region
    _
  $region29: #{tpu_custom_call.1} parent=0 // pred_fallthru
    _

</llo_original>
